<compile_context>
chip_gen: v7x
topology: tpu7x:2x2x1
jax: 0.10.0
libtpu: 0.0.40
codegen_flags: <defaults>
</compile_context>

<pallas_src>
import numpy as np
import jax
import jax.numpy as jnp
from jax.experimental import pallas as pl
from jax.experimental.pallas import tpu as pltpu


# ----------------------------------------------------------------------------
# Parameter setup (mirrors CDBLoss.__init__) — plain numpy glue.
# ----------------------------------------------------------------------------
def _sigmoid(x):
    return 1.0 / (1.0 + np.exp(-x))


def cdb_weights(class_difficulty, tau="dynamic"):
    class_difficulty = np.asarray(class_difficulty, dtype=np.float64)
    if tau == "dynamic":
        bias = (1.0 - np.min(class_difficulty)) / (1.0 - np.max(class_difficulty) + 0.01)
        tau_v = _sigmoid(bias)
    else:
        tau_v = float(tau)
    weights = class_difficulty ** tau_v
    weights = weights / weights.sum() * len(weights)
    return weights.astype(np.float32)


# ----------------------------------------------------------------------------
# Pallas kernel: per-tile partials of the weighted-NLL numerator and weight
# denominator.  Each grid step owns its own (1, 2) SMEM output block, so the
# batch axis is fully parallel (v7x: shards across both TensorCores) and the
# final tiny sum + divide happens in the wrapper.
# ----------------------------------------------------------------------------
def _cdb_loss_kernel(logits_ref, targets_ref, wt_ref, out_ref):
    x = logits_ref[...].astype(jnp.float32)       # (TILE_N, C), compute in f32
    t = targets_ref[...]                          # (TILE_N, 1) int32, -1 => padded row
    w_t = wt_ref[...]                             # (TILE_N, 1) f32, 0 for padded rows

    # numerically stable log-sum-exp over the class (lane) axis
    m = jnp.max(x, axis=-1, keepdims=True)                                # (TILE_N, 1)
    lse = jnp.log(jnp.sum(jnp.exp(x - m), axis=-1, keepdims=True)) + m    # (TILE_N, 1)

    # fused one-hot gather of x[t] (no dynamic gather on TPU).  Out-of-range
    # targets (padded rows, t = -1) give an all-zero one-hot and carry
    # w_t == 0, so they contribute nothing.
    col = jax.lax.broadcasted_iota(jnp.int32, x.shape, 1)                 # (TILE_N, C)
    x_t = jnp.sum(jnp.where(col == t, x, 0.0), axis=-1, keepdims=True)    # (TILE_N, 1)

    # -w[t] * logp[t] = w[t] * (lse - x[t])   (single subtract: less cancellation)
    out_ref[0, 0] = jnp.sum(w_t * (lse - x_t))
    out_ref[0, 1] = jnp.sum(w_t)


def _round_up(x, m):
    return (x + m - 1) // m * m


def _physical_vmem_bytes():
    try:
        return int(pltpu.get_tpu_info().vmem_capacity_bytes)
    except Exception:
        return 64 * 1024 * 1024          # conservative (v7x-sized) fallback


def cdb_loss(logits, targets, weights, *, tile_n=None):
    """logits: (N, C) float, targets: (N,) int, weights: (C,) f32 -> scalar loss."""
    n, c = logits.shape
    itemsize = jnp.dtype(logits.dtype).itemsize
    sublane = max(8, 32 // itemsize)      # f32: 8, bf16: 16, int8/fp8: 32

    vmem_phys = _physical_vmem_bytes()
    if tile_n is None:
        # Size the tile by bytes, not rows: f32 working block ≈ 1/12 of
        # physical VMEM.  Double-buffered native input + ~3 f32 temporaries
        # then stay under ~45% of physical VMEM on every chip generation.
        target_bytes = max(2 * 1024 * 1024, vmem_phys // 12)
        tile_n = max(sublane, target_bytes // max(1, c * 4))
    tile_n = max(sublane, (int(tile_n) // sublane) * sublane)
    tile_n = min(tile_n, _round_up(n, sublane))     # never exceed the (padded) batch

    n_pad = _round_up(n, tile_n)
    num_tiles = n_pad // tile_n

    # Wrapper-side weight gather: w_t = weights[targets], zeroed for invalid /
    # padded rows.  Removes two full (TILE_N, C) VPU passes from the kernel.
    # NOTE: unlike torch, out-of-range targets contribute zero instead of
    # raising (used deliberately for padding).
    t = targets.astype(jnp.int32)
    valid = (t >= 0) & (t < c)
    w_t = jnp.where(valid, weights.astype(jnp.float32)[jnp.clip(t, 0, c - 1)], 0.0)

    targets2d = t.reshape(n, 1)
    wt2d = w_t.reshape(n, 1)

    if n_pad != n:
        pad = n_pad - n
        logits = jnp.pad(logits, ((0, pad), (0, 0)))
        targets2d = jnp.pad(targets2d, ((0, pad), (0, 0)), constant_values=-1)
        wt2d = jnp.pad(wt2d, ((0, pad), (0, 0)))    # zero weight => no contribution

    cost = pl.CostEstimate(
        flops=5 * n_pad * c,
        transcendentals=n_pad * c + n_pad,
        bytes_accessed=n_pad * c * itemsize + n_pad * 8 + num_tiles * 8,
    )

    grid_spec = pltpu.PrefetchScalarGridSpec(
        num_scalar_prefetch=0,
        grid=(num_tiles,),
        in_specs=[
            pl.BlockSpec((tile_n, c), lambda i: (i, 0)),   # logits tile (pipelined)
            pl.BlockSpec((tile_n, 1), lambda i: (i, 0)),   # targets tile
            pl.BlockSpec((tile_n, 1), lambda i: (i, 0)),   # gathered w[t] tile
        ],
        out_specs=pl.BlockSpec((1, 2), lambda i: (i, 0), memory_space=pltpu.SMEM),
    )

    vmem_limit = min(96 * 1024 * 1024, max(32 * 1024 * 1024, (vmem_phys * 3) // 4))

    partials = pl.pallas_call(
        _cdb_loss_kernel,
        out_shape=jax.ShapeDtypeStruct((num_tiles, 2), jnp.float32),
        grid_spec=grid_spec,
        compiler_params=pltpu.CompilerParams(
            dimension_semantics=("parallel",),     # independent per-tile partials
            vmem_limit_bytes=vmem_limit,
        ),
        cost_estimate=cost,
    )(logits, targets2d, wt2d)

    # Tiny final reduction over per-tile partials (also better f32 accumulation
    # than one running scalar across all tiles).
    return jnp.sum(partials[:, 0]) / jnp.sum(partials[:, 1])


# ----------------------------------------------------------------------------
# Pure-JAX reference (matches torch.nn.CrossEntropyLoss(weight=w, reduction='mean')).
# ----------------------------------------------------------------------------
def cdb_loss_ref(logits, targets, weights):
    logp = jax.nn.log_softmax(logits.astype(jnp.float32), axis=-1)
    picked = jnp.take_along_axis(logp, targets[:, None], axis=-1)[:, 0]
    w_t = weights[targets]
    return jnp.sum(-w_t * picked) / jnp.sum(w_t)


if __name__ == "__main__":
    key = jax.random.PRNGKey(0)
    k1, k2, k3, k4, k5, k6 = jax.random.split(key, 6)

    # --- tiny demo consistent with the module (batch=8, 4 classes) ---------
    N, C = 8, 4
    class_difficulty = np.array([0.2, 0.55, 0.8, 0.35], dtype=np.float32)
    weights = jnp.asarray(cdb_weights(class_difficulty, tau="dynamic"))
    logits = jax.random.normal(k1, (N, C), dtype=jnp.float32)
    targets = jax.random.randint(k2, (N,), 0, C, dtype=jnp.int32)

    loss = jax.block_until_ready(cdb_loss(logits, targets, weights))
    ref = jax.block_until_ready(cdb_loss_ref(logits, targets, weights))
    assert np.allclose(np.asarray(loss), np.asarray(ref), rtol=1e-5, atol=1e-5), (
        float(loss), float(ref))

    # --- multi-tile + padded-tail path (per-tile partials + parallel grid) -
    N2, C2 = 300, 128
    cd2 = np.linspace(0.1, 0.9, C2).astype(np.float32)
    weights2 = jnp.asarray(cdb_weights(cd2, tau="dynamic"))
    logits2 = jax.random.normal(k3, (N2, C2), dtype=jnp.float32)
    targets2 = jax.random.randint(k4, (N2,), 0, C2, dtype=jnp.int32)

    loss2 = jax.block_until_ready(cdb_loss(logits2, targets2, weights2, tile_n=64))
    ref2 = jax.block_until_ready(cdb_loss_ref(logits2, targets2, weights2))
    assert np.allclose(np.asarray(loss2), np.asarray(ref2), rtol=1e-4, atol=1e-5), (
        float(loss2), float(ref2))

    # --- bf16 logits (exercises 16-sublane tile alignment + in-kernel cast) -
    N3, C3 = 100, 256
    cd3 = np.linspace(0.15, 0.85, C3).astype(np.float32)
    weights3 = jnp.asarray(cdb_weights(cd3, tau=1.0))
    logits3 = jax.random.normal(k5, (N3, C3), dtype=jnp.float32).astype(jnp.bfloat16)
    targets3 = jax.random.randint(k6, (N3,), 0, C3, dtype=jnp.int32)

    loss3 = jax.block_until_ready(cdb_loss(logits3, targets3, weights3))
    ref3 = jax.block_until_ready(cdb_loss_ref(logits3, targets3, weights3))
    assert np.allclose(np.asarray(loss3), np.asarray(ref3), rtol=1e-3, atol=1e-4), (
        float(loss3), float(ref3))

    print("KERNEL_OK")
</pallas_src>

<mosaic_0001>
module attributes {stable_mosaic.version = 11 : i64} {
  func.func @_cdb_loss_kernel(%arg0: i32, %arg1: memref<8x4xf32, #tpu.memory_space<vmem>>, %arg2: memref<8x1xi32, #tpu.memory_space<vmem>>, %arg3: memref<8x1xf32, #tpu.memory_space<vmem>>, %arg4: memref<1x2xf32, #tpu.memory_space<smem>>) attributes {dimension_semantics = [#tpu.dimension_semantics<parallel>], iteration_bounds = array<i64: 1>, scalar_prefetch = 0 : i64, scratch_operands = 0 : i64, tpu.core_type = #tpu.core_type<tc>, window_params = [{transform_indices = @transform_0, window_bounds = array<i64: 8, 4>}, {transform_indices = @transform_1, window_bounds = array<i64: 8, 1>}, {transform_indices = @transform_2, window_bounds = array<i64: 8, 1>}, {transform_indices = @transform_3, window_bounds = array<i64: 1, 2>}]} {
    %c0 = arith.constant 0 : index
    %c0_0 = arith.constant 0 : index
    %0 = vector.load %arg1[%c0, %c0_0] : memref<8x4xf32, #tpu.memory_space<vmem>>, vector<8x4xf32>
    %c0_1 = arith.constant 0 : index
    %c0_2 = arith.constant 0 : index
    %1 = vector.load %arg2[%c0_1, %c0_2] : memref<8x1xi32, #tpu.memory_space<vmem>>, vector<8x1xi32>
    %c0_3 = arith.constant 0 : index
    %c0_4 = arith.constant 0 : index
    %2 = vector.load %arg3[%c0_3, %c0_4] : memref<8x1xf32, #tpu.memory_space<vmem>>, vector<8x1xf32>
    %cst = arith.constant dense<0xFF800000> : vector<8xf32>
    %3 = vector.multi_reduction <maximumf>, %0, %cst [1] : vector<8x4xf32> to vector<8xf32>
    %4 = vector.shape_cast %3 : vector<8xf32> to vector<8x1xf32>
    %5 = vector.broadcast %4 : vector<8x1xf32> to vector<8x4xf32>
    %6 = arith.subf %0, %5 : vector<8x4xf32>
    %7 = math.exp %6 : vector<8x4xf32>
    %cst_5 = arith.constant dense<0.000000e+00> : vector<8xf32>
    %8 = vector.multi_reduction <add>, %7, %cst_5 [1] : vector<8x4xf32> to vector<8xf32>
    %9 = vector.shape_cast %8 : vector<8xf32> to vector<8x1xf32>
    %10 = math.log %9 : vector<8x1xf32>
    %11 = arith.addf %10, %4 : vector<8x1xf32>
    %12 = tpu.iota {dimensions = array<i32: 1>} : vector<8x4xi32>
    %13 = vector.broadcast %1 : vector<8x1xi32> to vector<8x4xi32>
    %14 = arith.cmpi eq, %12, %13 : vector<8x4xi32>
    %cst_6 = arith.constant 0.000000e+00 : f32
    %15 = vector.broadcast %cst_6 : f32 to vector<8x4xf32>
    %16 = arith.select %14, %0, %15 : vector<8x4xi1>, vector<8x4xf32>
    %cst_7 = arith.constant dense<0.000000e+00> : vector<8xf32>
    %17 = vector.multi_reduction <add>, %16, %cst_7 [1] : vector<8x4xf32> to vector<8xf32>
    %18 = vector.shape_cast %17 : vector<8xf32> to vector<8x1xf32>
    %19 = arith.subf %11, %18 : vector<8x1xf32>
    %20 = arith.mulf %2, %19 : vector<8x1xf32>
    %21 = vector.shape_cast %20 : vector<8x1xf32> to vector<1x8x1xf32>
    %cst_8 = arith.constant dense<0.000000e+00> : vector<1xf32>
    %22 = vector.multi_reduction <add>, %21, %cst_8 [1, 2] : vector<1x8x1xf32> to vector<1xf32>
    %23 = vector.shape_cast %22 : vector<1xf32> to vector<1x1x1xf32>
    %24 = vector.extract %23[0, 0, 0] : f32 from vector<1x1x1xf32>
    %c0_9 = arith.constant 0 : index
    %c0_10 = arith.constant 0 : index
    %25 = memref.load %arg4[%c0_9, %c0_10] : memref<1x2xf32, #tpu.memory_space<smem>>
    memref.store %24, %arg4[%c0_9, %c0_10] : memref<1x2xf32, #tpu.memory_space<smem>>
    %26 = vector.shape_cast %2 : vector<8x1xf32> to vector<1x8x1xf32>
    %cst_11 = arith.constant dense<0.000000e+00> : vector<1xf32>
    %27 = vector.multi_reduction <add>, %26, %cst_11 [1, 2] : vector<1x8x1xf32> to vector<1xf32>
    %28 = vector.shape_cast %27 : vector<1xf32> to vector<1x1x1xf32>
    %29 = vector.extract %28[0, 0, 0] : f32 from vector<1x1x1xf32>
    %c0_12 = arith.constant 0 : index
    %c1 = arith.constant 1 : index
    %30 = memref.load %arg4[%c0_12, %c1] : memref<1x2xf32, #tpu.memory_space<smem>>
    memref.store %29, %arg4[%c0_12, %c1] : memref<1x2xf32, #tpu.memory_space<smem>>
    return
  }
  func.func @transform_0(%arg0: i32) -> (i32, i32) {
    %c0_i32 = arith.constant 0 : i32
    %c0_i32_0 = arith.constant 0 : i32
    return %arg0, %c0_i32 : i32, i32
  }
  func.func @transform_1(%arg0: i32) -> (i32, i32) {
    %c0_i32 = arith.constant 0 : i32
    %c0_i32_0 = arith.constant 0 : i32
    return %arg0, %c0_i32 : i32, i32
  }
  func.func @transform_2(%arg0: i32) -> (i32, i32) {
    %c0_i32 = arith.constant 0 : i32
    %c0_i32_0 = arith.constant 0 : i32
    return %arg0, %c0_i32 : i32, i32
  }
  func.func @transform_3(%arg0: i32) -> (i32, i32) {
    %c0_i32 = arith.constant 0 : i32
    %c0_i32_0 = arith.constant 0 : i32
    return %arg0, %c0_i32 : i32, i32
  }
}

</mosaic_0001>

<llo_original>
// kernel: tpu_custom_call.1
$region0: #{tpu_custom_call.1}
  #allocation0 [shape = 'u32[]', space=smem, size = 0x4, offset = 0x4, fixed_abs, tag = 'smem constant byte address 0x4 - core index']
  #allocation1 [shape = 'u32[144,128]{1,0:T(1,128)}', space=vmem, size = 0x12000, scoped, tag = 'internal scratch']
  %s0 = inlined_call_operand.vmem [shape: f32[8,4], index: 0, kind: input, shape index: {}]
  %s1 = inlined_call_operand.vmem [shape: s32[8,1], index: 1, kind: input, shape index: {}]
  %s2 = inlined_call_operand.vmem [shape: f32[8,1], index: 2, kind: input, shape index: {}]
  %s3 = inlined_call_operand.hbm [shape: f32[1,2], index: 3, kind: output, shape index: {}]
  %s4 = sld [smem:[#allocation0]]
  $region22: #{tpu_custom_call.1} parent=0
    _
  %s6 = ssub.s32 1, %s4
  %s7 = scalar_select 0, %s6, %s4
  $region1: #{tpu_custom_call.1} parent=0
    #allocation2 [shape = 'u8[512]{0}', space=smem, size = 0x200, scoped, tag = 'output window, operand 0, single buffered']
    #allocation3 [shape = 's32[1]{0}', space=sflag, size = 0x4, scoped, tag = 'scoped memory for tpu_custom_call.1']
    %8 = vsyncpa [#allocation3], 0
    // Predicated region
    $region2: #{tpu_custom_call.1} parent=1 // pred_check
      _
    $region3: #{tpu_custom_call.1} parent=1 // pred_check_branch
      %10 = sbr.rel (0) target = $region5
    $region4: #{tpu_custom_call.1} parent=1 // pred_region
      _
    $region5: #{tpu_custom_call.1} parent=1 // pred_fallthru
      _
    // Predicated region
    $region6: #{tpu_custom_call.1} parent=1 // pred_check
      _
    $region7: #{tpu_custom_call.1} parent=1 // pred_check_branch
      %12 = sbr.rel (0) target = $region9
    $region8: #{tpu_custom_call.1} parent=1 // pred_region
      _
    $region9: #{tpu_custom_call.1} parent=1 // pred_fallthru
      _
    // Predicated region
    $region10: #{tpu_custom_call.1} parent=1 // pred_check
      _
    $region11: #{tpu_custom_call.1} parent=1 // pred_check_branch
      %14 = sbr.rel (0) target = $region13
    $region12: #{tpu_custom_call.1} parent=1 // pred_region
      _
    $region13: #{tpu_custom_call.1} parent=1 // pred_fallthru
      _
    %v15 = vld [vmem:[%s0] sm:$0xff]
    %v16 = vld [vmem:[%s1] sm:$0xff]
    %v17 = vld [vmem:[%s2] sm:$0xff]
    %vm18 = vcmask 31744
    %v19 = vsel %vm18, %v15, -inf
    %20 = vmax.xlane.f32.xlu0 %v19
    %v21 = vpop.xlane.xlu0 %20
    %v22 = vsub.f32 %v15, %v21
    %v23 = vmul.f32 %v22, 1.442695
    %v24 = vpow.pop %v23
    %v25 = vsel %vm18, %v24, 0.0
    %26 = vadd.xlane.f32.xlu0 %v25
    %v27 = vpop.xlane.xlu0 %26
    %v28 = vlog2.pop %v27
    %v29 = vmul.f32 %v28, 0.6931472
    %v30 = vadd.f32 %v29, %v21
    %v31 = vlaneseq
    %v32 = vand.u32 %v31, 127
    %33 = vset.pattern.permute.xlu0 0
    %34 = vperm.xlu0 %33, %v16
    %v35 = vpop.permute.xlu0 %34
    %vm36 = vcmp.eq.s32.totalorder %v32, %v35
    %v37 = vsel %vm36, %v15, 0.0
    %v38 = vsel %vm18, %v37, 0.0
    %39 = vadd.xlane.f32.xlu0 %v38
    %v40 = vpop.xlane.xlu0 %39
    %v41 = vsub.f32 %v30, %v40
    %v42 = vmul.f32 %v17, %v41
    %vm43 = vcmask 7168
    %v44 = vsel %vm43, %v42, 0.0
    %45 = vadd.xlane.f32.xlu0 %v44
    %v46 = vpop.xlane.xlu0 %45
    %v47 = vrot.slane %v46, 4
    %v48 = vadd.f32 %v46, %v47
    %v49 = vrot.slane %v48, 2
    %v50 = vadd.f32 %v48, %v49
    %v51 = vrot.slane %v50, 1
    %v52 = vadd.f32 %v50, %v51
    %s53 = vtos %v52
    %s54 = scalar_lea.smem [#allocation2], 0
    %55 = sst [smem:[%s54]] %s53
    %v56 = vsel %vm43, %v17, 0.0
    %57 = vadd.xlane.f32.xlu0 %v56
    %v58 = vpop.xlane.xlu0 %57
    %v59 = vrot.slane %v58, 4
    %v60 = vadd.f32 %v58, %v59
    %v61 = vrot.slane %v60, 2
    %v62 = vadd.f32 %v60, %v61
    %v63 = vrot.slane %v62, 1
    %v64 = vadd.f32 %v62, %v63
    %s65 = vtos %v64
    %s66 = scalar_lea.smem [#allocation2], 1
    %67 = sst [smem:[%s66]] %s65
    // Predicated region
    $region14: #{tpu_custom_call.1} parent=1 // pred_check
      _
    $region15: #{tpu_custom_call.1} parent=1 // pred_check_branch
      %69 = sbr.rel (0) target = $region17
    $region16: #{tpu_custom_call.1} parent=1 // pred_region
      %s71 = ssub.s32 16, 16
      %72 = vsyncadd [#allocation3], %s71
      %75 = dma.smem_to_hbm [#allocation2], 16, %s3, [#allocation3]
    $region17: #{tpu_custom_call.1} parent=1 // pred_fallthru
      _
    // Predicated region
    $region18: #{tpu_custom_call.1} parent=1 // pred_check
      _
    $region19: #{tpu_custom_call.1} parent=1 // pred_check_branch
      %77 = sbr.rel (0) target = $region21
    $region20: #{tpu_custom_call.1} parent=1 // pred_region
      %78 = dma.done [#allocation3], 16
    $region21: #{tpu_custom_call.1} parent=1 // pred_fallthru
      _
    %79 = sfence
    %80 = vsyncpa [#allocation3], 1

</llo_original>
